<compile_context>
chip_gen: v7x
topology: tpu7x:2x2x1
jax: 0.10.0
libtpu: 0.0.40
codegen_flags: <defaults>
</compile_context>

<pallas_src>
import jax
import jax.numpy as jnp
from jax.experimental import pallas as pl
from jax.experimental.pallas import tpu as pltpu


def _relu_kernel(x_ref, o_ref):
    # relu(relu(x)) == relu(x): one VPU maximum per vreg.
    o_ref[...] = jnp.maximum(x_ref[...], 0)


# Native sublane tile per dtype itemsize (sub-32-bit dtypes pack along sublanes).
_SUBLANE_TILE = {4: 8, 2: 16, 1: 32}

_SINGLE_BLOCK_BYTES = 1 << 20        # above this, force >=2 grid programs (v7x: 2 TCs)
_DEFAULT_BLOCK_BYTES = 4 << 20       # ~4 MiB blocks; 4 buffers -> ~16 MiB resident
_VMEM_LIMIT_BYTES = 32 << 20         # explicit scoped-VMEM limit, safe on v5e/v6e/v7x


def _pick_lanes(n: int, sub: int):
    """Widest lane count dividing n; prefer one that fills sublanes too."""
    cands = (1024, 512, 256, 128)
    for c in cands:  # first pass: rows must also be a multiple of the sublane tile
        if n % c == 0 and (n // c) % sub == 0:
            return c
    for c in cands:  # second pass: any exact divisor
        if n % c == 0:
            return c
    return None


def _relu_2d(x2d: jax.Array, *, target_block_bytes: int, donate: bool) -> jax.Array:
    """Run the relu kernel over a lane-dense (rows, lanes) slab."""
    rows, lanes = x2d.shape
    itemsize = x2d.dtype.itemsize
    sub = _SUBLANE_TILE.get(itemsize, 8)
    total_bytes = rows * lanes * itemsize
    n = rows * lanes

    cost = pl.CostEstimate(flops=n, transcendentals=0, bytes_accessed=2 * total_bytes)
    io_alias = {0: 0} if donate else {}

    if total_bytes <= _SINGLE_BLOCK_BYTES or rows < 2 * sub:
        # Small input: one full-array block, single kernel invocation.
        return pl.pallas_call(
            _relu_kernel,
            out_shape=jax.ShapeDtypeStruct((rows, lanes), x2d.dtype),
            input_output_aliases=io_alias,
            cost_estimate=cost,
        )(x2d)

    # Tiled path: ~4 MiB lane-dense blocks, 1-D parallel grid, >= 2 programs.
    tile_rows = (target_block_bytes // (lanes * itemsize)) // sub * sub
    tile_rows = max(sub, tile_rows)
    half_rows = pl.cdiv(pl.cdiv(rows, 2), sub) * sub   # guarantees grid >= 2
    tile_rows = min(tile_rows, half_rows)
    grid = (pl.cdiv(rows, tile_rows),)

    return pl.pallas_call(
        _relu_kernel,
        out_shape=jax.ShapeDtypeStruct((rows, lanes), x2d.dtype),
        grid_spec=pltpu.PrefetchScalarGridSpec(
            num_scalar_prefetch=0,
            grid=grid,
            in_specs=[pl.BlockSpec((tile_rows, lanes), lambda i: (i, 0))],
            out_specs=pl.BlockSpec((tile_rows, lanes), lambda i: (i, 0)),
        ),
        compiler_params=pltpu.CompilerParams(
            dimension_semantics=("parallel",),
            vmem_limit_bytes=_VMEM_LIMIT_BYTES,
        ),
        input_output_aliases=io_alias,
        cost_estimate=cost,
    )(x2d)


def simple_relu_model(
    x: jax.Array,
    *,
    target_block_bytes: int = _DEFAULT_BLOCK_BYTES,
    donate: bool = False,
) -> jax.Array:
    """Equivalent of SimpleReluModel.forward: relu(relu(x)) for any shape."""
    orig_shape = x.shape
    n = x.size
    if n == 0:
        return x

    sub = _SUBLANE_TILE.get(x.dtype.itemsize, 8)
    x_flat = jnp.reshape(x, (-1,))
    lanes = _pick_lanes(n, sub)

    if lanes is not None:
        rows = n // lanes
        out_flat = jnp.reshape(
            _relu_2d(
                jnp.reshape(x_flat, (rows, lanes)),
                target_block_bytes=target_block_bytes,
                donate=donate,
            ),
            (-1,),
        )
    else:
        # n not a multiple of 128: kernel on the 128-aligned prefix, tiny tail
        # handled separately (avoids a full-tensor pad + slice HBM round-trip).
        main = (n // 128) * 128
        if main == 0:
            # Whole tensor is < 128 elements: pad one tiny block (negligible).
            xp = jnp.pad(x_flat, (0, 128 - n))
            out_flat = jnp.reshape(
                _relu_2d(jnp.reshape(xp, (1, 128)),
                         target_block_bytes=target_block_bytes, donate=False),
                (-1,),
            )[:n]
        else:
            head = _relu_2d(
                jnp.reshape(x_flat[:main], (main // 128, 128)),
                target_block_bytes=target_block_bytes,
                donate=False,
            )
            tail = jnp.maximum(x_flat[main:], 0)
            out_flat = jnp.concatenate([jnp.reshape(head, (-1,)), tail])

    return jnp.reshape(out_flat, orig_shape)


if __name__ == "__main__":
    key = jax.random.PRNGKey(0)

    # Small NCHW input consistent with the PyTorch test module.
    x = jax.random.normal(key, (2, 4, 16, 16), dtype=jnp.float32)
    out = jax.block_until_ready(simple_relu_model(x))
    ref = jnp.maximum(jnp.maximum(x, 0.0), 0.0)
    assert out.shape == x.shape and out.dtype == x.dtype
    assert bool(jnp.allclose(out, ref)), "mismatch vs reference (small input)"

    # Second check exercising the tiled (multi-block, >=2 programs) path.
    x_big = jax.random.normal(jax.random.PRNGKey(1), (8, 16, 128, 128), dtype=jnp.float32)
    out_big = jax.block_until_ready(simple_relu_model(x_big))
    ref_big = jnp.maximum(x_big, 0.0)
    assert bool(jnp.allclose(out_big, ref_big)), "mismatch vs reference (tiled input)"

    # Third check: non-128-divisible element count exercises the prefix+tail path.
    x_odd = jax.random.normal(jax.random.PRNGKey(2), (3, 5, 7), dtype=jnp.float32)
    out_odd = jax.block_until_ready(simple_relu_model(x_odd))
    assert bool(jnp.allclose(out_odd, jnp.maximum(x_odd, 0.0))), "mismatch (odd input)"

    print("KERNEL_OK")
</pallas_src>

<mosaic_0001>
module attributes {stable_mosaic.version = 11 : i64} {
  func.func @_relu_kernel(%arg0: memref<8x256xf32, #tpu.memory_space<vmem>>, %arg1: memref<8x256xf32, #tpu.memory_space<vmem>>) attributes {dimension_semantics = [], scalar_prefetch = 0 : i64, scratch_operands = 0 : i64, tpu.core_type = #tpu.core_type<tc>} {
    %c0 = arith.constant 0 : index
    %c0_0 = arith.constant 0 : index
    %0 = vector.load %arg0[%c0, %c0_0] : memref<8x256xf32, #tpu.memory_space<vmem>>, vector<8x256xf32>
    %cst = arith.constant 0.000000e+00 : f32
    %1 = vector.broadcast %cst : f32 to vector<8x256xf32>
    %2 = arith.maximumf %0, %1 : vector<8x256xf32>
    %c0_1 = arith.constant 0 : index
    %c0_2 = arith.constant 0 : index
    %3 = vector.load %arg1[%c0_1, %c0_2] : memref<8x256xf32, #tpu.memory_space<vmem>>, vector<8x256xf32>
    tpu.vector_store %arg1[%c0_1, %c0_2], %2 {strides = array<i32>} : memref<8x256xf32, #tpu.memory_space<vmem>>, vector<8x256xf32>,
    return
  }
}

</mosaic_0001>

<llo_original>
// kernel: tpu_custom_call.1
$region0: #{tpu_custom_call.1}
  #allocation0 [shape = 'u32[]', space=smem, size = 0x4, offset = 0x4, fixed_abs, tag = 'smem constant byte address 0x4 - core index']
  #allocation1 [shape = 'u32[144,128]{1,0:T(1,128)}', space=vmem, size = 0x12000, scoped, tag = 'internal scratch']
  %s0 = inlined_call_operand.hbm [shape: f32[8,256], index: 0, kind: input, shape index: {}]
  %s1 = inlined_call_operand.hbm [shape: f32[8,256], index: 1, kind: output, shape index: {}]
  %s2 = sld [smem:[#allocation0]]
  $region18: #{tpu_custom_call.1} parent=0
    _
  %s4 = ssub.s32 1, %s2
  %s5 = scalar_select 0, %s4, %s2
  $region1: #{tpu_custom_call.1} parent=0
    #allocation2 [shape = 'u8[8192]{0}', space=vmem, size = 0x2000, scoped, tag = 'input window, operand 0, single buffered']
    #allocation3 [shape = 's32[1]{0}', space=sflag, size = 0x4, scoped, tag = 'scoped memory for tpu_custom_call.1']
    #allocation4 [shape = 's32[1]{0}', space=sflag, size = 0x4, scoped, tag = 'scoped memory for tpu_custom_call.1']
    #allocation5 [shape = 'u8[8192]{0}', space=vmem, size = 0x2000, scoped, tag = 'output window, operand 0, single buffered']
    %6 = vsyncpa [#allocation3], 0
    %7 = vsyncpa [#allocation4], 0
    // Predicated region
    $region2: #{tpu_custom_call.1} parent=1 // pred_check
      _
    $region3: #{tpu_custom_call.1} parent=1 // pred_check_branch
      %9 = sbr.rel (0) target = $region5
    $region4: #{tpu_custom_call.1} parent=1 // pred_region
      %s11 = ssub.s32 256, 256
      %12 = vsyncadd [#allocation3], %s11
      %s14 = sshll.u32 [#allocation2], 4
      %s15 = int_to_ptr.vmem [resolvable:$true] %s14
      %17 = dma.hbm_to_vmem [thread:$0]  %s0, 256, %s15, [#allocation3]
    $region5: #{tpu_custom_call.1} parent=1 // pred_fallthru
      _
    // Predicated region
    $region6: #{tpu_custom_call.1} parent=1 // pred_check
      _
    $region7: #{tpu_custom_call.1} parent=1 // pred_check_branch
      %19 = sbr.rel (0) target = $region9
    $region8: #{tpu_custom_call.1} parent=1 // pred_region
      %20 = dma.done [#allocation3], 256
    $region9: #{tpu_custom_call.1} parent=1 // pred_fallthru
      _
    %v21 = vld [vmem:[#allocation2] sm:$0xff]
    %v22 = vld [vmem:[#allocation2 + $0x8] sm:$0xff]
    %v23 = vmax.f32 %v21, 0.0
    %v24 = vmax.f32 %v22, 0.0
    %25 = vst [vmem:[#allocation5] sm:$0xff] %v23
    %26 = vst [vmem:[#allocation5 + $0x8] sm:$0xff] %v24
    // Predicated region
    $region10: #{tpu_custom_call.1} parent=1 // pred_check
      _
    $region11: #{tpu_custom_call.1} parent=1 // pred_check_branch
      %28 = sbr.rel (0) target = $region13
    $region12: #{tpu_custom_call.1} parent=1 // pred_region
      %s30 = ssub.s32 256, 256
      %31 = vsyncadd [#allocation4], %s30
      %s33 = sshll.u32 [#allocation5], 4
      %s34 = int_to_ptr.vmem [resolvable:$true] %s33
      %36 = dma.vmem_to_hbm [thread:$0]  %s34, 256, %s1, [#allocation4]
    $region13: #{tpu_custom_call.1} parent=1 // pred_fallthru
      _
    // Predicated region
    $region14: #{tpu_custom_call.1} parent=1 // pred_check
      _
    $region15: #{tpu_custom_call.1} parent=1 // pred_check_branch
      %38 = sbr.rel (0) target = $region17
    $region16: #{tpu_custom_call.1} parent=1 // pred_region
      %39 = dma.done [#allocation4], 256
    $region17: #{tpu_custom_call.1} parent=1 // pred_fallthru
      _
    %40 = vsyncpa [#allocation3], 1
    %41 = vsyncpa [#allocation4], 1

</llo_original>
